<compile_context>
chip_gen: v7x
topology: tpu7x:2x2x1
jax: 0.10.0
libtpu: 0.0.40
codegen_flags: <defaults>
</compile_context>

<pallas_src>
import functools

import jax
import jax.numpy as jnp
from jax import lax
from jax.experimental import pallas as pl
from jax.experimental.pallas import tpu as pltpu


# ---------------------------------------------------------------------------
# Pallas kernels
# ---------------------------------------------------------------------------
def _gauss_smooth_kernel(gh_ref, f_ref, gw_ref, o_ref):
    # Separable gaussian smoothing of one displacement-noise field: Gh @ F @ Gw  (f32 MXU).
    tmp = jnp.dot(gh_ref[...], f_ref[0], preferred_element_type=jnp.float32)
    o_ref[0] = jnp.dot(tmp, gw_ref[...], preferred_element_type=jnp.float32)


def _warp_intensity_kernel(taps_ref, wts_ref, lbln_ref, scale_ref, nstd_ref,
                           noise_ref, img_ref, lbl_ref):
    # Fused epilogue (pure VPU, lane-dense (C, tile) blocks):
    #   image = clip(clip(bilinear_4tap * scale, 0, 1) + noise * nstd, 0, 1)
    #   label = nearest tap (passthrough)
    w = wts_ref[...]                       # (2, tl): [frac_row ; frac_col]
    fr = w[0:1, :]
    fc = w[1:2, :]
    gr = 1.0 - fr
    gc = 1.0 - fc
    img = (taps_ref[0] * (gr * gc) + taps_ref[1] * (gr * fc)
           + taps_ref[2] * (fr * gc) + taps_ref[3] * (fr * fc))
    img = jnp.clip(img * scale_ref[...], 0.0, 1.0)
    img = jnp.clip(img + noise_ref[...] * nstd_ref[...], 0.0, 1.0)
    img_ref[...] = img
    lbl_ref[...] = lbln_ref[...]


# ---------------------------------------------------------------------------
# pallas_call wrappers
# ---------------------------------------------------------------------------
def _pick_tile(hw, max_tile=32768):
    # Largest lane-dense tile (multiple of 128) dividing hw; whole row for small/odd hw.
    if hw % 128 != 0 or hw <= max_tile:
        return hw
    t = max_tile - (max_tile % 128)
    while t > 128 and hw % t != 0:
        t -= 128
    return t


def _gauss_smooth(gh, fields, gw):
    # fields: (2, H, W) stacked [dx-noise ; dy-noise] -> smoothed (2, H, W)
    _, H, W = fields.shape
    return pl.pallas_call(
        _gauss_smooth_kernel,
        out_shape=jax.ShapeDtypeStruct((2, H, W), jnp.float32),
        grid=(2,),
        in_specs=[pl.BlockSpec((H, H), lambda i: (0, 0)),
                  pl.BlockSpec((1, H, W), lambda i: (i, 0, 0)),
                  pl.BlockSpec((W, W), lambda i: (0, 0))],
        out_specs=pl.BlockSpec((1, H, W), lambda i: (i, 0, 0)),
        compiler_params=pltpu.CompilerParams(dimension_semantics=("parallel",)),
    )(gh, fields, gw)


def _warp_intensity(taps, wts, lbl_n, scale, nstd, noise):
    _, C, hw = taps.shape
    tl = _pick_tile(hw)
    return pl.pallas_call(
        _warp_intensity_kernel,
        out_shape=(jax.ShapeDtypeStruct((C, hw), jnp.float32),
                   jax.ShapeDtypeStruct((1, hw), jnp.float32)),
        grid=(hw // tl,),
        in_specs=[pl.BlockSpec((4, C, tl), lambda i: (0, 0, i)),
                  pl.BlockSpec((2, tl), lambda i: (0, i)),
                  pl.BlockSpec((1, tl), lambda i: (0, i)),
                  pl.BlockSpec((C, 1), lambda i: (0, 0)),
                  pl.BlockSpec((C, 1), lambda i: (0, 0)),
                  pl.BlockSpec((C, tl), lambda i: (0, i))],
        out_specs=(pl.BlockSpec((C, tl), lambda i: (0, i)),
                   pl.BlockSpec((1, tl), lambda i: (0, i))),
        compiler_params=pltpu.CompilerParams(dimension_semantics=("parallel",)),
    )(taps, wts, lbl_n, scale, nstd, noise)


# ---------------------------------------------------------------------------
# On-device helpers (all under jit, no host round trips)
# ---------------------------------------------------------------------------
def _gaussian_matrix(n, sigma, truncate=4.0):
    # scipy gaussian_filter1d weights, mode='constant' (zero outside), taps beyond the
    # truncation radius masked exactly.
    radius = int(truncate * float(sigma) + 0.5)
    i = jnp.arange(n)
    d = (i[:, None] - i[None, :]).astype(jnp.float32)
    w = jnp.exp(-0.5 * (d / sigma) ** 2)
    t = jnp.arange(-radius, radius + 1, dtype=jnp.float32)
    norm = jnp.sum(jnp.exp(-0.5 * (t / sigma) ** 2))
    return jnp.where(jnp.abs(d) <= radius, w / norm, 0.0)


# ---------------------------------------------------------------------------
# End-to-end jitted augmentation
# ---------------------------------------------------------------------------
@functools.partial(jax.jit, static_argnames=("aug_prob",))
def advanced_medical_aug(image, label, key, aug_prob=0.8):
    H, W, C = image.shape            # assumes H == W (square images, as rot90 requires)
    hw = H * W

    keys = jax.random.split(key, 10)
    do_aug = jax.random.uniform(keys[0]) < aug_prob
    use_rotflip = jax.random.uniform(keys[1]) > 0.5
    k_rot = jax.random.randint(keys[2], (), 0, 4)
    flip_axis = jax.random.randint(keys[3], (), 0, 2)
    angle = jax.random.uniform(keys[4], (), minval=-25.0, maxval=25.0)
    do_elastic = jax.random.uniform(keys[5]) < 0.3

    ii, jj = jnp.meshgrid(jnp.arange(H, dtype=jnp.float32),
                          jnp.arange(W, dtype=jnp.float32), indexing="ij")

    # ---- stage 2 first (composition): elastic displacement field, zero when inactive ----
    def _elastic_field(k):
        alpha, sigma = 1000.0, 30.0
        gh = _gaussian_matrix(H, sigma) * alpha        # fold alpha into row-smoothing matrix
        gw = _gaussian_matrix(W, sigma)
        noise = jax.random.uniform(k, (2, H, W), dtype=jnp.float32) * 2.0 - 1.0
        return _gauss_smooth(gh, noise, gw)            # (2, H, W) = [dx ; dy]

    disp = lax.cond(do_elastic, _elastic_field,
                    lambda k: jnp.zeros((2, H, W), jnp.float32), keys[6])
    re = ii + disp[0]
    ce = jj + disp[1]

    # ---- stage 1: rot_flip OR rotate, applied to the elastic coordinates (composed warp) ----
    def _rotflip_map(rc):
        r, c = rc
        # reference applies rot90 then flip -> source map is rot_src(flip_src(.))
        r, c = lax.cond(flip_axis == 0,
                        lambda: ((H - 1.0) - r, c),
                        lambda: (r, (W - 1.0) - c))
        return lax.switch(k_rot,
                          [lambda: (r, c),
                           lambda: (c, (W - 1.0) - r),
                           lambda: ((H - 1.0) - r, (W - 1.0) - c),
                           lambda: ((H - 1.0) - c, r)])

    def _rotate_map(rc):
        r, c = rc
        a = jnp.deg2rad(angle)
        ci, cj = (H - 1) / 2.0, (W - 1) / 2.0
        cos_a, sin_a = jnp.cos(a), jnp.sin(a)
        return (cos_a * (r - ci) + sin_a * (c - cj) + ci,
                -sin_a * (r - ci) + cos_a * (c - cj) + cj)

    rows, cols = lax.cond(
        do_aug,
        lambda rc: lax.cond(use_rotflip, _rotflip_map, _rotate_map, rc),
        lambda rc: rc,
        (re, ce))

    rows_f = rows.reshape(-1)
    cols_f = cols.reshape(-1)

    # boundary handling: 'reflect' when elastic fired, clamp ('nearest') otherwise
    use_reflect = do_elastic

    def _map_idx(i, n):
        clamped = jnp.clip(i, 0, n - 1)
        m = jnp.mod(i, 2 * n)
        refl = jnp.where(m >= n, 2 * n - 1 - m, m)
        return jnp.where(use_reflect, refl, clamped)

    r0 = jnp.floor(rows_f)
    c0 = jnp.floor(cols_f)
    fr = (rows_f - r0).astype(jnp.float32)
    fc = (cols_f - c0).astype(jnp.float32)
    r0i = r0.astype(jnp.int32)
    c0i = c0.astype(jnp.int32)
    rr0 = _map_idx(r0i, H)
    rr1 = _map_idx(r0i + 1, H)
    cc0 = _map_idx(c0i, W)
    cc1 = _map_idx(c0i + 1, W)

    img_flat = image.reshape(hw, C).T.astype(jnp.float32)     # (C, hw) lane-dense
    lbl_flat = label.reshape(1, hw).astype(jnp.float32)       # (1, hw)

    # TODO(synk): data-dependent per-pixel tap gather done with XLA gather (no robust
    # Pallas/Mosaic lane-gather); the combine + intensity run in the Pallas kernel below.
    taps = jnp.stack([img_flat[:, rr0 * W + cc0],
                      img_flat[:, rr0 * W + cc1],
                      img_flat[:, rr1 * W + cc0],
                      img_flat[:, rr1 * W + cc1]], axis=0)    # (4, C, hw)

    rn = _map_idx(jnp.round(rows_f).astype(jnp.int32), H)
    cn = _map_idx(jnp.round(cols_f).astype(jnp.int32), W)
    lbl_n = lbl_flat[:, rn * W + cn]                          # (1, hw) nearest (order=0)

    wts = jnp.stack([fr, fc], axis=0)                         # (2, hw)

    # ---- intensity_augment params: per-channel scale in [0.7,1.3], p=0.2 gaussian noise ----
    scale = jax.random.uniform(keys[7], (C,), minval=0.7, maxval=1.3)[:, None]   # (C,1)
    flag = (jax.random.uniform(keys[8], (C,)) < 0.2)[:, None]
    nstd = jnp.where(flag, 0.05, 0.0).astype(jnp.float32)                        # (C,1)
    noise = jax.random.normal(keys[9], (C, hw), dtype=jnp.float32)

    img_o, lbl_o = _warp_intensity(taps, wts, lbl_n, scale, nstd, noise)

    image_out = img_o.reshape(C, H, W).transpose(1, 2, 0)
    label_out = lbl_o.reshape(H, W)
    return image_out, label_out


if __name__ == "__main__":
    key = jax.random.PRNGKey(0)
    k_img, k_lbl, k_aug = jax.random.split(key, 3)
    H, W, C = 16, 16, 4
    image = jax.random.uniform(k_img, (H, W, C), dtype=jnp.float32)
    label = jax.random.randint(k_lbl, (H, W), 0, 4).astype(jnp.float32)

    img_out, lbl_out = advanced_medical_aug(image, label, k_aug, aug_prob=0.8)
    jax.block_until_ready((img_out, lbl_out))
    assert img_out.shape == (H, W, C) and lbl_out.shape == (H, W)
    assert bool(jnp.all(jnp.isfinite(img_out))) and bool(jnp.all(jnp.isfinite(lbl_out)))
    print("KERNEL_OK")
</pallas_src>

<mosaic_0001>
module attributes {stable_mosaic.version = 11 : i64} {
  func.func @_gauss_smooth_kernel(%arg0: i32, %arg1: memref<16x16xf32, #tpu.memory_space<vmem>>, %arg2: memref<1x16x16xf32, #tpu.memory_space<vmem>>, %arg3: memref<16x16xf32, #tpu.memory_space<vmem>>, %arg4: memref<1x16x16xf32, #tpu.memory_space<vmem>>) attributes {dimension_semantics = [#tpu.dimension_semantics<parallel>], iteration_bounds = array<i64: 2>, scalar_prefetch = 0 : i64, scratch_operands = 0 : i64, tpu.core_type = #tpu.core_type<tc>, window_params = [{pipeline_mode = #tpu.pipeline_mode<synchronous>, transform_indices = @transform_0, window_bounds = array<i64: 16, 16>}, {transform_indices = @transform_1, window_bounds = array<i64: 1, 16, 16>}, {pipeline_mode = #tpu.pipeline_mode<synchronous>, transform_indices = @transform_2, window_bounds = array<i64: 16, 16>}, {transform_indices = @transform_3, window_bounds = array<i64: 1, 16, 16>}]} {
    %c0 = arith.constant 0 : index
    %c0_0 = arith.constant 0 : index
    %0 = vector.load %arg1[%c0, %c0_0] : memref<16x16xf32, #tpu.memory_space<vmem>>, vector<16x16xf32>
    %c0_1 = arith.constant 0 : index
    %c0_2 = arith.constant 0 : index
    %c0_3 = arith.constant 0 : index
    %1 = vector.load %arg2[%c0_1, %c0_2, %c0_3] : memref<1x16x16xf32, #tpu.memory_space<vmem>>, vector<1x16x16xf32>
    %2 = vector.shape_cast %1 : vector<1x16x16xf32> to vector<16x16xf32>
    %cst = arith.constant dense<0.000000e+00> : vector<16x16xf32>
    %3 = tpu.matmul %0, %2, %cst {dimension_numbers = #tpu.dot_dimension_numbers<[1], [0], [0], [1], [0, 0, 1, 1], [], []>} : vector<16x16xf32>, vector<16x16xf32>, vector<16x16xf32> -> vector<16x16xf32>
    %c0_4 = arith.constant 0 : index
    %c0_5 = arith.constant 0 : index
    %4 = vector.load %arg3[%c0_4, %c0_5] : memref<16x16xf32, #tpu.memory_space<vmem>>, vector<16x16xf32>
    %cst_6 = arith.constant dense<0.000000e+00> : vector<16x16xf32>
    %5 = tpu.matmul %3, %4, %cst_6 {dimension_numbers = #tpu.dot_dimension_numbers<[1], [0], [0], [1], [0, 0, 1, 1], [], []>} : vector<16x16xf32>, vector<16x16xf32>, vector<16x16xf32> -> vector<16x16xf32>
    %c0_7 = arith.constant 0 : index
    %c0_8 = arith.constant 0 : index
    %c0_9 = arith.constant 0 : index
    %6 = vector.load %arg4[%c0_7, %c0_8, %c0_9] : memref<1x16x16xf32, #tpu.memory_space<vmem>>, vector<1x16x16xf32>
    %7 = vector.shape_cast %6 : vector<1x16x16xf32> to vector<16x16xf32>
    %8 = vector.shape_cast %5 : vector<16x16xf32> to vector<1x16x16xf32>
    tpu.vector_store %arg4[%c0_7, %c0_8, %c0_9], %8 {strides = array<i32>} : memref<1x16x16xf32, #tpu.memory_space<vmem>>, vector<1x16x16xf32>,
    return
  }
  func.func @transform_0(%arg0: i32) -> (i32, i32) {
    %c0_i32 = arith.constant 0 : i32
    %c0_i32_0 = arith.constant 0 : i32
    %c0_i32_1 = arith.constant 0 : i32
    return %c0_i32, %c0_i32_0 : i32, i32
  }
  func.func @transform_1(%arg0: i32) -> (i32, i32, i32) {
    %c0_i32 = arith.constant 0 : i32
    %c0_i32_0 = arith.constant 0 : i32
    %c0_i32_1 = arith.constant 0 : i32
    return %arg0, %c0_i32, %c0_i32_0 : i32, i32, i32
  }
  func.func @transform_2(%arg0: i32) -> (i32, i32) {
    %c0_i32 = arith.constant 0 : i32
    %c0_i32_0 = arith.constant 0 : i32
    %c0_i32_1 = arith.constant 0 : i32
    return %c0_i32, %c0_i32_0 : i32, i32
  }
  func.func @transform_3(%arg0: i32) -> (i32, i32, i32) {
    %c0_i32 = arith.constant 0 : i32
    %c0_i32_0 = arith.constant 0 : i32
    %c0_i32_1 = arith.constant 0 : i32
    return %arg0, %c0_i32, %c0_i32_0 : i32, i32, i32
  }
}

module attributes {stable_mosaic.version = 11 : i64} {
  func.func @_warp_intensity_kernel(%arg0: i32, %arg1: memref<4x4x256xf32, #tpu.memory_space<vmem>>, %arg2: memref<2x256xf32, #tpu.memory_space<vmem>>, %arg3: memref<1x256xf32, #tpu.memory_space<vmem>>, %arg4: memref<4x1xf32, #tpu.memory_space<vmem>>, %arg5: memref<4x1xf32, #tpu.memory_space<vmem>>, %arg6: memref<4x256xf32, #tpu.memory_space<vmem>>, %arg7: memref<4x256xf32, #tpu.memory_space<vmem>>, %arg8: memref<1x256xf32, #tpu.memory_space<vmem>>) attributes {dimension_semantics = [#tpu.dimension_semantics<parallel>], iteration_bounds = array<i64: 1>, scalar_prefetch = 0 : i64, scratch_operands = 0 : i64, tpu.core_type = #tpu.core_type<tc>, window_params = [{transform_indices = @transform_0, window_bounds = array<i64: 4, 4, 256>}, {transform_indices = @transform_1, window_bounds = array<i64: 2, 256>}, {transform_indices = @transform_2, window_bounds = array<i64: 1, 256>}, {pipeline_mode = #tpu.pipeline_mode<synchronous>, transform_indices = @transform_3, window_bounds = array<i64: 4, 1>}, {pipeline_mode = #tpu.pipeline_mode<synchronous>, transform_indices = @transform_4, window_bounds = array<i64: 4, 1>}, {transform_indices = @transform_5, window_bounds = array<i64: 4, 256>}, {transform_indices = @transform_6, window_bounds = array<i64: 4, 256>}, {transform_indices = @transform_7, window_bounds = array<i64: 1, 256>}]} {
    %c0 = arith.constant 0 : index
    %c0_0 = arith.constant 0 : index
    %0 = vector.load %arg2[%c0, %c0_0] : memref<2x256xf32, #tpu.memory_space<vmem>>, vector<2x256xf32>
    %1 = vector.extract_strided_slice %0 {offsets = [0, 0], sizes = [1, 256], strides = [1, 1]} : vector<2x256xf32> to vector<1x256xf32>
    %2 = vector.extract_strided_slice %0 {offsets = [1, 0], sizes = [1, 256], strides = [1, 1]} : vector<2x256xf32> to vector<1x256xf32>
    %cst = arith.constant 1.000000e+00 : f32
    %3 = vector.broadcast %cst : f32 to vector<1x256xf32>
    %4 = arith.subf %3, %1 : vector<1x256xf32>
    %cst_1 = arith.constant 1.000000e+00 : f32
    %5 = vector.broadcast %cst_1 : f32 to vector<1x256xf32>
    %6 = arith.subf %5, %2 : vector<1x256xf32>
    %c0_2 = arith.constant 0 : index
    %c0_3 = arith.constant 0 : index
    %c0_4 = arith.constant 0 : index
    %7 = vector.load %arg1[%c0_2, %c0_3, %c0_4] : memref<4x4x256xf32, #tpu.memory_space<vmem>>, vector<1x4x256xf32>
    %8 = vector.shape_cast %7 : vector<1x4x256xf32> to vector<4x256xf32>
    %9 = arith.mulf %4, %6 : vector<1x256xf32>
    %10 = vector.broadcast %9 : vector<1x256xf32> to vector<4x256xf32>
    %11 = arith.mulf %8, %10 : vector<4x256xf32>
    %c1 = arith.constant 1 : index
    %c0_5 = arith.constant 0 : index
    %c0_6 = arith.constant 0 : index
    %12 = vector.load %arg1[%c1, %c0_5, %c0_6] : memref<4x4x256xf32, #tpu.memory_space<vmem>>, vector<1x4x256xf32>
    %13 = vector.shape_cast %12 : vector<1x4x256xf32> to vector<4x256xf32>
    %14 = arith.mulf %4, %2 : vector<1x256xf32>
    %15 = vector.broadcast %14 : vector<1x256xf32> to vector<4x256xf32>
    %16 = arith.mulf %13, %15 : vector<4x256xf32>
    %17 = arith.addf %11, %16 : vector<4x256xf32>
    %c2 = arith.constant 2 : index
    %c0_7 = arith.constant 0 : index
    %c0_8 = arith.constant 0 : index
    %18 = vector.load %arg1[%c2, %c0_7, %c0_8] : memref<4x4x256xf32, #tpu.memory_space<vmem>>, vector<1x4x256xf32>
    %19 = vector.shape_cast %18 : vector<1x4x256xf32> to vector<4x256xf32>
    %20 = arith.mulf %1, %6 : vector<1x256xf32>
    %21 = vector.broadcast %20 : vector<1x256xf32> to vector<4x256xf32>
    %22 = arith.mulf %19, %21 : vector<4x256xf32>
    %23 = arith.addf %17, %22 : vector<4x256xf32>
    %c3 = arith.constant 3 : index
    %c0_9 = arith.constant 0 : index
    %c0_10 = arith.constant 0 : index
    %24 = vector.load %arg1[%c3, %c0_9, %c0_10] : memref<4x4x256xf32, #tpu.memory_space<vmem>>, vector<1x4x256xf32>
    %25 = vector.shape_cast %24 : vector<1x4x256xf32> to vector<4x256xf32>
    %26 = arith.mulf %1, %2 : vector<1x256xf32>
    %27 = vector.broadcast %26 : vector<1x256xf32> to vector<4x256xf32>
    %28 = arith.mulf %25, %27 : vector<4x256xf32>
    %29 = arith.addf %23, %28 : vector<4x256xf32>
    %c0_11 = arith.constant 0 : index
    %c0_12 = arith.constant 0 : index
    %30 = vector.load %arg4[%c0_11, %c0_12] : memref<4x1xf32, #tpu.memory_space<vmem>>, vector<4x1xf32>
    %31 = vector.broadcast %30 : vector<4x1xf32> to vector<4x256xf32>
    %32 = arith.mulf %29, %31 : vector<4x256xf32>
    %cst_13 = arith.constant 0.000000e+00 : f32
    %cst_14 = arith.constant 1.000000e+00 : f32
    %33 = vector.broadcast %cst_13 : f32 to vector<4x256xf32>
    %34 = arith.maximumf %33, %32 : vector<4x256xf32>
    %35 = vector.broadcast %cst_14 : f32 to vector<4x256xf32>
    %36 = arith.minimumf %35, %34 : vector<4x256xf32>
    %c0_15 = arith.constant 0 : index
    %c0_16 = arith.constant 0 : index
    %37 = vector.load %arg6[%c0_15, %c0_16] : memref<4x256xf32, #tpu.memory_space<vmem>>, vector<4x256xf32>
    %c0_17 = arith.constant 0 : index
    %c0_18 = arith.constant 0 : index
    %38 = vector.load %arg5[%c0_17, %c0_18] : memref<4x1xf32, #tpu.memory_space<vmem>>, vector<4x1xf32>
    %39 = vector.broadcast %38 : vector<4x1xf32> to vector<4x256xf32>
    %40 = arith.mulf %37, %39 : vector<4x256xf32>
    %41 = arith.addf %36, %40 : vector<4x256xf32>
    %cst_19 = arith.constant 0.000000e+00 : f32
    %cst_20 = arith.constant 1.000000e+00 : f32
    %42 = vector.broadcast %cst_19 : f32 to vector<4x256xf32>
    %43 = arith.maximumf %42, %41 : vector<4x256xf32>
    %44 = vector.broadcast %cst_20 : f32 to vector<4x256xf32>
    %45 = arith.minimumf %44, %43 : vector<4x256xf32>
    %c0_21 = arith.constant 0 : index
    %c0_22 = arith.constant 0 : index
    %46 = vector.load %arg7[%c0_21, %c0_22] : memref<4x256xf32, #tpu.memory_space<vmem>>, vector<4x256xf32>
    tpu.vector_store %arg7[%c0_21, %c0_22], %45 {strides = array<i32>} : memref<4x256xf32, #tpu.memory_space<vmem>>, vector<4x256xf32>,
    %c0_23 = arith.constant 0 : index
    %c0_24 = arith.constant 0 : index
    %47 = vector.load %arg3[%c0_23, %c0_24] : memref<1x256xf32, #tpu.memory_space<vmem>>, vector<1x256xf32>
    %c0_25 = arith.constant 0 : index
    %c0_26 = arith.constant 0 : index
    %48 = vector.load %arg8[%c0_25, %c0_26] : memref<1x256xf32, #tpu.memory_space<vmem>>, vector<1x256xf32>
    tpu.vector_store %arg8[%c0_25, %c0_26], %47 {strides = array<i32>} : memref<1x256xf32, #tpu.memory_space<vmem>>, vector<1x256xf32>,
    return
  }
  func.func @transform_0(%arg0: i32) -> (i32, i32, i32) {
    %c0_i32 = arith.constant 0 : i32
    %c0_i32_0 = arith.constant 0 : i32
    %c0_i32_1 = arith.constant 0 : i32
    return %c0_i32, %c0_i32_0, %arg0 : i32, i32, i32
  }
  func.func @transform_1(%arg0: i32) -> (i32, i32) {
    %c0_i32 = arith.constant 0 : i32
    %c0_i32_0 = arith.constant 0 : i32
    return %c0_i32, %arg0 : i32, i32
  }
  func.func @transform_2(%arg0: i32) -> (i32, i32) {
    %c0_i32 = arith.constant 0 : i32
    %c0_i32_0 = arith.constant 0 : i32
    return %c0_i32, %arg0 : i32, i32
  }
  func.func @transform_3(%arg0: i32) -> (i32, i32) {
    %c0_i32 = arith.constant 0 : i32
    %c0_i32_0 = arith.constant 0 : i32
    %c0_i32_1 = arith.constant 0 : i32
    return %c0_i32, %c0_i32_0 : i32, i32
  }
  func.func @transform_4(%arg0: i32) -> (i32, i32) {
    %c0_i32 = arith.constant 0 : i32
    %c0_i32_0 = arith.constant 0 : i32
    %c0_i32_1 = arith.constant 0 : i32
    return %c0_i32, %c0_i32_0 : i32, i32
  }
  func.func @transform_5(%arg0: i32) -> (i32, i32) {
    %c0_i32 = arith.constant 0 : i32
    %c0_i32_0 = arith.constant 0 : i32
    return %c0_i32, %arg0 : i32, i32
  }
  func.func @transform_6(%arg0: i32) -> (i32, i32) {
    %c0_i32 = arith.constant 0 : i32
    %c0_i32_0 = arith.constant 0 : i32
    return %c0_i32, %arg0 : i32, i32
  }
  func.func @transform_7(%arg0: i32) -> (i32, i32) {
    %c0_i32 = arith.constant 0 : i32
    %c0_i32_0 = arith.constant 0 : i32
    return %c0_i32, %arg0 : i32, i32
  }
}

</mosaic_0001>

<llo_original>
// kernel: branch_1_fun.1
$region0: #{branch_1_fun.1}
  #allocation0 [shape = 'u32[]', space=smem, size = 0x4, offset = 0x4, fixed_abs, tag = 'smem constant byte address 0x4 - core index']
  #allocation1 [shape = 'u32[144,128]{1,0:T(1,128)}', space=vmem, size = 0x12000, scoped, tag = 'internal scratch']
  %s0 = inlined_call_operand.vmem [shape: f32[16,16], index: 0, kind: input, shape index: {}]
  %s1 = inlined_call_operand.vmem [shape: f32[2,16,16], index: 1, kind: input, shape index: {}]
  %s2 = inlined_call_operand.vmem [shape: f32[16,16], index: 2, kind: input, shape index: {}]
  %s3 = inlined_call_operand.hbm [shape: f32[2,16,16], index: 3, kind: output, shape index: {}]
  %s4 = sld [smem:[#allocation0]]
  $region45: #{branch_1_fun.1} parent=0
    _
  %s6 = ssub.s32 1, %s4
  %s7 = scalar_select 0, %s6, %s4
  $region1: #{branch_1_fun.1} parent=0
    #allocation2 [shape = 'u8[16384]{0}', space=vmem, size = 0x4000, scoped, tag = 'output window, operand 0']
    #allocation3 [shape = 's32[2]{0}', space=sflag, size = 0x8, scoped, tag = 'scoped memory for branch_1_fun.1']
    %8 = vsyncpa [#allocation3], 0
    %s9 = scalar_lea.sflag [#allocation3], 1
    %10 = vsyncpa %s9, 0
    loop: start=0, step=1, limit=4
    $region2: #{branch_1_fun.1} parent=1 // loop_pre_header
      _
    $region3: #{branch_1_fun.1} parent=1 // loop_header
      %s12 = sphi 0, %s16
      %p13 = scmp.ge.s32.totalorder %s12, 4
      %s20 = sphi 0, %s20
      %s22 = sphi 0, %s20
      %s23 = sphi 0, %s22
      %s37 = sphi 0, %s23
      %s43 = sphi 0, %s45
      %s46 = sphi 0, %s43
      %s47 = sphi 0, %s46
      %s63 = sphi 0, %s47
      %s67 = sphi 0, %s67
      %s69 = sphi 0, %s67
      %s70 = sphi 0, %s69
      %s84 = sphi 0, %s70
      %s90 = sphi 0, %s92
      %s93 = sphi 0, %s90
      %s94 = sphi 0, %s93
      %s110 = sphi 0, %s94
    $region4: #{branch_1_fun.1} parent=1 // loop_header_branch
      %15 = sbr.rel (%p13) target = $region8
    $region5: #{branch_1_fun.1} parent=1 // loop_body
      %s17 = ssub.s32 %s12, 1
      %s18 = ssub.s32 %s12, 2
      %s19 = sadd.s32 %s12, 1
      %s21 = sadd.s32 %s20, 1
      %p24 = scmp.eq.s32.totalorder %s12, 1
      %p25 = scmp.ne.s32.totalorder %s20, %s22
      %p26 = scmp.eq.s32.totalorder %s12, 0
      %p27 = por %p25, %p26
      %p28 = scmp.ne.s32.totalorder %s20, %s22
      %p29 = scmp.eq.s32.totalorder %s17, 1
      %p30 = por %p28, %p29
      %p31 = scmp.ne.s32.totalorder %s22, %s23
      %p32 = scmp.eq.s32.totalorder %s17, 0
      %p33 = por %p31, %p32
      %p34 = scmp.ne.s32.totalorder %s22, %s23
      %p35 = scmp.eq.s32.totalorder %s18, 1
      %p36 = por %p34, %p35
      %p38 = scmp.ne.s32.totalorder %s23, %s37
      %p39 = scmp.eq.s32.totalorder %s18, 0
      %p40 = por %p38, %p39
      %s41 = ssub.s32 %s12, %s19
      %p42 = scmp.eq.s32.totalorder %s41, 0
      %s44 = sadd.s32 %s43, 1
      %s45 = scalar_select %p42, %s43, %s44
      %p48 = pneg %p42
      %p49 = scmp.eq.s32.totalorder %s12, 1
      %p50 = por %p48, %p49
      %p51 = scmp.ne.s32.totalorder %s43, %s46
      %p52 = scmp.eq.s32.totalorder %s12, 0
      %p53 = por %p51, %p52
      %p54 = scmp.ne.s32.totalorder %s43, %s46
      %p55 = scmp.eq.s32.totalorder %s17, 1
      %p56 = por %p54, %p55
      %p57 = scmp.ne.s32.totalorder %s46, %s47
      %p58 = scmp.eq.s32.totalorder %s17, 0
      %p59 = por %p57, %p58
      %p60 = scmp.ne.s32.totalorder %s46, %s47
      %p61 = scmp.eq.s32.totalorder %s18, 1
      %p62 = por %p60, %p61
      %p64 = scmp.ne.s32.totalorder %s47, %s63
      %p65 = scmp.eq.s32.totalorder %s18, 0
      %p66 = por %p64, %p65
      %s68 = sadd.s32 %s67, 1
      %p71 = scmp.eq.s32.totalorder %s12, 1
      %p72 = scmp.ne.s32.totalorder %s67, %s69
      %p73 = scmp.eq.s32.totalorder %s12, 0
      %p74 = por %p72, %p73
      %p75 = scmp.ne.s32.totalorder %s67, %s69
      %p76 = scmp.eq.s32.totalorder %s17, 1
      %p77 = por %p75, %p76
      %p78 = scmp.ne.s32.totalorder %s69, %s70
      %p79 = scmp.eq.s32.totalorder %s17, 0
      %p80 = por %p78, %p79
      %p81 = scmp.ne.s32.totalorder %s69, %s70
      %p82 = scmp.eq.s32.totalorder %s18, 1
      %p83 = por %p81, %p82
      %p85 = scmp.ne.s32.totalorder %s70, %s84
      %p86 = scmp.eq.s32.totalorder %s18, 0
      %p87 = por %p85, %p86
      %s88 = ssub.s32 %s12, %s19
      %p89 = scmp.eq.s32.totalorder %s88, 0
      %s91 = sadd.s32 %s90, 1
      %s92 = scalar_select %p89, %s90, %s91
      %p95 = pneg %p89
      %p96 = scmp.eq.s32.totalorder %s12, 1
      %p97 = por %p95, %p96
      %p98 = scmp.ne.s32.totalorder %s90, %s93
      %p99 = scmp.eq.s32.totalorder %s12, 0
      %p100 = por %p98, %p99
      %p101 = scmp.ne.s32.totalorder %s90, %s93
      %p102 = scmp.eq.s32.totalorder %s17, 1
      %p103 = por %p101, %p102
      %p104 = scmp.ne.s32.totalorder %s93, %s94
      %p105 = scmp.eq.s32.totalorder %s17, 0
      %p106 = por %p104, %p105
      %p107 = scmp.ne.s32.totalorder %s93, %s94
      %p108 = scmp.eq.s32.totalorder %s18, 1
      %p109 = por %p107, %p108
      %p111 = scmp.ne.s32.totalorder %s94, %s110
      %p112 = scmp.eq.s32.totalorder %s18, 0
      %p113 = por %p111, %p112
      %p114 = scmp.le.s32.totalorder 1, %s12
      %p115 = scmp.lt.s32.totalorder %s12, 3
      %p116 = pnand %p114, %p115
      %p117 = pneg %p116
      // Predicated region
      $region9: #{branch_1_fun.1} parent=5 // pred_check
        _
      $region10: #{branch_1_fun.1} parent=5 // pred_check_branch
        %119 = sbr.rel (%p116) target = $region12
      $region11: #{branch_1_fun.1} parent=5 // pred_region
        %s120 = ssub.s32 %s12, 1
        // Predicated region
        $region13: #{branch_1_fun.1} parent=11 // pred_check
          %p121 = pneg %p33
        $region14: #{branch_1_fun.1} parent=11 // pred_check_branch
          %123 = sbr.rel (%p121) target = $region16
        $region15: #{branch_1_fun.1} parent=11 // pred_region
          _
        $region16: #{branch_1_fun.1} parent=11 // pred_fallthru
          _
        // Predicated region
        $region17: #{branch_1_fun.1} parent=11 // pred_check
          %p124 = pneg %p80
        $region18: #{branch_1_fun.1} parent=11 // pred_check_branch
          %126 = sbr.rel (%p124) target = $region20
        $region19: #{branch_1_fun.1} parent=11 // pred_region
          _
        $region20: #{branch_1_fun.1} parent=11 // pred_fallthru
          _
      $region12: #{branch_1_fun.1} parent=5 // pred_fallthru
        _
      %p127 = scmp.lt.s32.totalorder %s12, 2
      // Predicated region
      $region21: #{branch_1_fun.1} parent=5 // pred_check
        %p128 = pneg %p127
      $region22: #{branch_1_fun.1} parent=5 // pred_check_branch
        %130 = sbr.rel (%p128) target = $region24
      $region23: #{branch_1_fun.1} parent=5 // pred_region
        // Predicated region
        $region25: #{branch_1_fun.1} parent=23 // pred_check
          %p131 = pneg %p53
        $region26: #{branch_1_fun.1} parent=23 // pred_check_branch
          %133 = sbr.rel (%p131) target = $region28
        $region27: #{branch_1_fun.1} parent=23 // pred_region
          %p134 = scmp.lt.s32.totalorder %s12, 1
          %s135 = scalar_select %p134, %s12, 1
          %s136 = smul.addr %s135, 2
          %s137 = smul.addr %s136, 8
          %s138 = scalar_lea.vmem %s1, %s137
        $region28: #{branch_1_fun.1} parent=23 // pred_fallthru
          _
      $region24: #{branch_1_fun.1} parent=5 // pred_fallthru
        _
      %p139 = scmp.le.s32.totalorder 1, %s12
      %p140 = scmp.lt.s32.totalorder %s12, 3
      %p141 = pnand %p139, %p140
      %p142 = pneg %p141
      // Predicated region
      $region29: #{branch_1_fun.1} parent=5 // pred_check
        _
      $region30: #{branch_1_fun.1} parent=5 // pred_check_branch
        %144 = sbr.rel (%p141) target = $region32
      $region31: #{branch_1_fun.1} parent=5 // pred_region
        %s145 = ssub.s32 %s12, 1
        %p146 = pneg %p33
        %p147 = pneg %p30
        %p148 = scmp.lt.s32.totalorder %s17, 1
        %s149 = scalar_select %p148, %s17, 1
        %s150 = smul.addr %s149, 2
        %s151 = smul.addr %s150, 8
        %s152 = scalar_lea.vmem %s1, %s151
        %p153 = pneg %p59
        %p154 = pneg %p56
        %p155 = pneg %p80
        %p156 = pneg %p77
        %p157 = pneg %p106
        %p158 = pneg %p103
        %s159 = sand.u32 %s93, 1
        %s160 = scalar_lea.sflag [#allocation3], %s159
        %s161 = sand.u32 %s93, 1
        %s162 = smul.addr %s161, 16
        %s163 = scalar_lea.vmem [#allocation2], %s162
        %p164 = scmp.lt.s32.totalorder %s17, 1
        %s165 = scalar_select %p164, %s17, 1
        %s166 = smul.addr %s165, 2
        %s167 = smul.addr %s166, 8
        %s168 = scalar_lea.vmem %s1, %s167
        %v169 = vld [vmem:[%s0] sm:$0xff]
        %v170 = vld [vmem:[%s0 + $0x8] sm:$0xff]
        %v171 = vld [vmem:[%s168] sm:$0xff]
        %v172 = vld [vmem:[%s168 + $0x8] sm:$0xff]
        %vm173 = vcmask 130048
        %v175 = vsel %vm173, %v169, 0
        %v178 = vsel %vm173, %v170, 0
        %180 = vmatprep.subr.mxu0 0.0
        %181 = vmatpush1.msra.mxu0 %v171
        %182 = vmatprep.subr.mxu0 0.0
        %183 = vmatpush1.msra.mxu0 %v172
        %184 = vmatprep.subr.mxu0 0.0
        %185 = vmatpush1.msra.mxu0 0.0
        %186 = vmatprep.subr.mxu0 0.0
        %187 = vmatpush1.msra.mxu0 0.0
        %188 = vmatprep.subr.mxu0 0.0
        %189 = vmatpush1.msra.mxu0 0.0
        %190 = vmatprep.subr.mxu0 0.0
        %191 = vmatpush1.msra.mxu0 0.0
        %192 = vmatprep.subr.mxu0 0.0
        %193 = vmatpush1.msra.mxu0 0.0
        %194 = vmatprep.subr.mxu0 0.0
        %195 = vmatpush1.msra.mxu0 0.0
        %196 = vmatprep.subr.mxu0 0.0
        %197 = vmatpush1.msra.mxu0 0.0
        %198 = vmatprep.subr.mxu0 0.0
        %199 = vmatpush1.msra.mxu0 0.0
        %200 = vmatprep.subr.mxu0 0.0
        %201 = vmatpush1.msra.mxu0 0.0
        %202 = vmatprep.subr.mxu0 0.0
        %203 = vmatpush1.msra.mxu0 0.0
        %204 = vmatprep.subr.mxu0 0.0
        %205 = vmatpush1.msra.mxu0 0.0
        %206 = vmatprep.subr.mxu0 0.0
        %207 = vmatpush1.msra.mxu0 0.0
        %208 = vmatprep.subr.mxu0 0.0
        %209 = vmatpush1.msra.mxu0 0.0
        %210 = vmatprep.subr.mxu0 0.0
        %211 = vmatpush1.msra.mxu0 0.0
        %212 = vmatprep.subr.mxu0 0.0
        %213 = vmatpush1.msra.mxu0 0.0
        %214 = vmatprep.subr.mxu0 0.0
        %215 = vmatpush1.msra.mxu0 0.0
        %216 = vmatprep.subr.mxu0 0.0
        %217 = vmatpush1.msra.mxu0 0.0
        %218 = vmatprep.subr.mxu0 0.0
        %219 = vmatpush1.msra.mxu0 0.0
        %220 = vmatprep.subr.mxu0 0.0
        %221 = vmatpush1.msra.mxu0 0.0
        %222 = vmatprep.subr.mxu0 0.0
        %223 = vmatpush1.msra.mxu0 0.0
        %224 = vmatprep.subr.mxu0 0.0
        %225 = vmatpush1.msra.mxu0 0.0
        %226 = vmatprep.subr.mxu0 0.0
        %227 = vmatpush1.msra.mxu0 0.0
        %228 = vmatprep.subr.mxu0 0.0
        %229 = vmatpush1.msra.mxu0 0.0
        %230 = vmatprep.subr.mxu0 0.0
        %231 = vmatpush1.msra.mxu0 0.0
        %232 = vmatprep.subr.mxu0 0.0
        %233 = vmatpush1.msra.mxu0 0.0
        %234 = vmatprep.subr.mxu0 0.0
        %235 = vmatpush1.msra.mxu0 0.0
        %236 = vmatprep.subr.mxu0 0.0
        %237 = vmatpush1.msra.mxu0 0.0
        %238 = vmatprep.subr.mxu0 0.0
        %239 = vmatpush1.msra.mxu0 0.0
        %240 = vmatprep.subr.mxu0 0.0
        %241 = vmatpush1.msra.mxu0 0.0
        %242 = vmatprep.subr.mxu0 0.0
        %243 = vmatpush1.msra.mxu0 0.0
        %244 = vmatprep.mubr.f32.mxu0 0.0
        %245 = vmatmul.mubr.f32.gmra.mrb[0].mxu0 %v175
        %v246 = vpop.f32.mrb[0].mxu0
        %v247 = vadd.f32 0.0, %v246
        %v248 = vpop.f32.mrb[0].mxu0
        %249 = vmatprep.mubr.f32.mxu0 0.0
        %250 = vmatmul.mubr.f32.gmra.mrb[0].mxu0 %v178
        %v251 = vpop.f32.mrb[0].mxu0
        %v252 = vadd.f32 0.0, %v251
        %v253 = vpop.f32.mrb[0].mxu0
        %254 = vdwg.mxu0
        %v255 = vld [vmem:[%s2] sm:$0xff]
        %v256 = vld [vmem:[%s2 + $0x8] sm:$0xff]
        %v258 = vsel %vm173, %v247, 0
        %v261 = vsel %vm173, %v252, 0
        %263 = vmatprep.subr.mxu0 0.0
        %264 = vmatpush1.msra.mxu0 %v255
        %265 = vmatprep.subr.mxu0 0.0
        %266 = vmatpush1.msra.mxu0 %v256
        %267 = vmatprep.subr.mxu0 0.0
        %268 = vmatpush1.msra.mxu0 0.0
        %269 = vmatprep.subr.mxu0 0.0
        %270 = vmatpush1.msra.mxu0 0.0
        %271 = vmatprep.subr.mxu0 0.0
        %272 = vmatpush1.msra.mxu0 0.0
        %273 = vmatprep.subr.mxu0 0.0
        %274 = vmatpush1.msra.mxu0 0.0
        %275 = vmatprep.subr.mxu0 0.0
        %276 = vmatpush1.msra.mxu0 0.0
        %277 = vmatprep.subr.mxu0 0.0
        %278 = vmatpush1.msra.mxu0 0.0
        %279 = vmatprep.subr.mxu0 0.0
        %280 = vmatpush1.msra.mxu0 0.0
        %281 = vmatprep.subr.mxu0 0.0
        %282 = vmatpush1.msra.mxu0 0.0
        %283 = vmatprep.subr.mxu0 0.0
        %284 = vmatpush1.msra.mxu0 0.0
        %285 = vmatprep.subr.mxu0 0.0
        %286 = vmatpush1.msra.mxu0 0.0
        %287 = vmatprep.subr.mxu0 0.0
        %288 = vmatpush1.msra.mxu0 0.0
        %289 = vmatprep.subr.mxu0 0.0
        %290 = vmatpush1.msra.mxu0 0.0
        %291 = vmatprep.subr.mxu0 0.0
        %292 = vmatpush1.msra.mxu0 0.0
        %293 = vmatprep.subr.mxu0 0.0
        %294 = vmatpush1.msra.mxu0 0.0
        %295 = vmatprep.subr.mxu0 0.0
        %296 = vmatpush1.msra.mxu0 0.0
        %297 = vmatprep.subr.mxu0 0.0
        %298 = vmatpush1.msra.mxu0 0.0
        %299 = vmatprep.subr.mxu0 0.0
        %300 = vmatpush1.msra.mxu0 0.0
        %301 = vmatprep.subr.mxu0 0.0
        %302 = vmatpush1.msra.mxu0 0.0
        %303 = vmatprep.subr.mxu0 0.0
        %304 = vmatpush1.msra.mxu0 0.0
        %305 = vmatprep.subr.mxu0 0.0
        %306 = vmatpush1.msra.mxu0 0.0
        %307 = vmatprep.subr.mxu0 0.0
        %308 = vmatpush1.msra.mxu0 0.0
        %309 = vmatprep.subr.mxu0 0.0
        %310 = vmatpush1.msra.mxu0 0.0
        %311 = vmatprep.subr.mxu0 0.0
        %312 = vmatpush1.msra.mxu0 0.0
        %313 = vmatprep.subr.mxu0 0.0
        %314 = vmatpush1.msra.mxu0 0.0
        %315 = vmatprep.subr.mxu0 0.0
        %316 = vmatpush1.msra.mxu0 0.0
        %317 = vmatprep.subr.mxu0 0.0
        %318 = vmatpush1.msra.mxu0 0.0
        %319 = vmatprep.subr.mxu0 0.0
        %320 = vmatpush1.msra.mxu0 0.0
        %321 = vmatprep.subr.mxu0 0.0
        %322 = vmatpush1.msra.mxu0 0.0
        %323 = vmatprep.subr.mxu0 0.0
        %324 = vmatpush1.msra.mxu0 0.0
        %325 = vmatprep.subr.mxu0 0.0
        %326 = vmatpush1.msra.mxu0 0.0
        %327 = vmatprep.mubr.f32.mxu0 0.0
        %328 = vmatmul.mubr.f32.gmra.mrb[0].mxu0 %v258
        %v329 = vpop.f32.mrb[0].mxu0
        %v330 = vadd.f32 0.0, %v329
        %v331 = vpop.f32.mrb[0].mxu0
        %332 = vmatprep.mubr.f32.mxu0 0.0
        %333 = vmatmul.mubr.f32.gmra.mrb[0].mxu0 %v261
        %v334 = vpop.f32.mrb[0].mxu0
        %v335 = vadd.f32 0.0, %v334
        %v336 = vpop.f32.mrb[0].mxu0
        %337 = vdwg.mxu0
        %338 = vst.msk [vmem:[%s163] sm:$0xff] %vm173, %v330
        %339 = vst.msk [vmem:[%s163 + $0x8] sm:$0xff] %vm173, %v335
        %s340 = sand.u32 %s93, 1
        %s341 = scalar_lea.sflag [#allocation3], %s340
        %s342 = sand.u32 %s93, 1
        %s343 = smul.addr %s342, 16
        %s344 = scalar_lea.vmem [#allocation2], %s343
        // Predicated region
        $region33: #{branch_1_fun.1} parent=31 // pred_check
          %p345 = pneg %p103
        $region34: #{branch_1_fun.1} parent=31 // pred_check_branch
          %347 = sbr.rel (%p345) target = $region36
        $region35: #{branch_1_fun.1} parent=31 // pred_region
          %s349 = ssub.s32 256, 256
          %350 = vsyncadd %s341, %s349
          %s351 = smul.addr %s17, 2
          %s352 = smul.addr %s351, 128
          %s353 = scalar_lea.hbm %s3, %s352
          %s354 = sshll.u32 %s344, 4
          %s355 = int_to_ptr.vmem [resolvable:$true] %s354
          %360 = dma.vmem_to_hbm [thread:$0]  %s355, 256, %s353, %s341, 128, 128, 8
        $region36: #{branch_1_fun.1} parent=31 // pred_fallthru
          _
      $region32: #{branch_1_fun.1} parent=5 // pred_fallthru
        _
      %p361 = scmp.le.s32.totalorder 2, %s12
      // Predicated region
      $region37: #{branch_1_fun.1} parent=5 // pred_check
        %p362 = pneg %p361
      $region38: #{branch_1_fun.1} parent=5 // pred_check_branch
        %364 = sbr.rel (%p362) target = $region40
      $region39: #{branch_1_fun.1} parent=5 // pred_region
        %s365 = ssub.s32 %s12, 2
        // Predicated region
        $region41: #{branch_1_fun.1} parent=39 // pred_check
          %p366 = pneg %p109
        $region42: #{branch_1_fun.1} parent=39 // pred_check_branch
          %368 = sbr.rel (%p366) target = $region44
        $region43: #{branch_1_fun.1} parent=39 // pred_region
          %s369 = sand.u32 %s94, 1
          %s370 = scalar_lea.sflag [#allocation3], %s369
          %s371 = sand.u32 %s94, 1
          %s372 = smul.addr %s371, 16
          %s373 = scalar_lea.vmem [#allocation2], %s372
          %374 = dma.done %s370, 256
        $region44: #{branch_1_fun.1} parent=39 // pred_fallthru
          _
      $region40: #{branch_1_fun.1} parent=5 // pred_fallthru
        _
    $region6: #{branch_1_fun.1} parent=1 // loop_footer
      %s16 = sadd.s32 1, %s12
    $region7: #{branch_1_fun.1} parent=1 // loop_footer_branch
      %11 = sbr.rel target = $region3
    $region8: #{branch_1_fun.1} parent=1 // loop_exit
      _
    %375 = vsyncpa [#allocation3], 1
    %s376 = scalar_lea.sflag [#allocation3], 1
    %377 = vsyncpa %s376, 1

// kernel: advanced_medical_aug.3
$region0: #{advanced_medical_aug.3}
  #allocation0 [shape = 'u32[]', space=smem, size = 0x4, offset = 0x4, fixed_abs, tag = 'smem constant byte address 0x4 - core index']
  #allocation1 [shape = 'u32[144,128]{1,0:T(1,128)}', space=vmem, size = 0x12000, scoped, tag = 'internal scratch']
  %s0 = inlined_call_operand.vmem [shape: f32[4,4,256], index: 0, kind: input, shape index: {}]
  %s1 = inlined_call_operand.vmem [shape: f32[2,256], index: 1, kind: input, shape index: {}]
  %s2 = inlined_call_operand.vmem [shape: f32[1,256], index: 2, kind: input, shape index: {}]
  %s3 = inlined_call_operand.vmem [shape: f32[4,1], index: 3, kind: input, shape index: {}]
  %s4 = inlined_call_operand.vmem [shape: f32[4,1], index: 4, kind: input, shape index: {}]
  %s5 = inlined_call_operand.vmem [shape: f32[4,256], index: 5, kind: input, shape index: {}]
  %s6 = inlined_call_operand.vmem [shape: f32[4,256], index: 6, kind: output, shape index: {0}]
  %s7 = inlined_call_operand.vmem [shape: f32[1,256], index: 7, kind: output, shape index: {1}]
  %8 = xla_tuple %s6, %s7
  %s9 = sld [smem:[#allocation0]]
  $region42: #{advanced_medical_aug.3} parent=0
    _
  %s11 = ssub.s32 1, %s9
  %s12 = scalar_select 0, %s11, %s9
  // Predicated region
  $region2: #{advanced_medical_aug.3} parent=0 // pred_check
    _
  $region3: #{advanced_medical_aug.3} parent=0 // pred_check_branch
    %14 = sbr.rel (0) target = $region5
  $region4: #{advanced_medical_aug.3} parent=0 // pred_region
    _
  $region5: #{advanced_medical_aug.3} parent=0 // pred_fallthru
    _
  // Predicated region
  $region6: #{advanced_medical_aug.3} parent=0 // pred_check
    _
  $region7: #{advanced_medical_aug.3} parent=0 // pred_check_branch
    %16 = sbr.rel (0) target = $region9
  $region8: #{advanced_medical_aug.3} parent=0 // pred_region
    _
  $region9: #{advanced_medical_aug.3} parent=0 // pred_fallthru
    _
  // Predicated region
  $region10: #{advanced_medical_aug.3} parent=0 // pred_check
    _
  $region11: #{advanced_medical_aug.3} parent=0 // pred_check_branch
    %18 = sbr.rel (0) target = $region13
  $region12: #{advanced_medical_aug.3} parent=0 // pred_region
    _
  $region13: #{advanced_medical_aug.3} parent=0 // pred_fallthru
    _
  // Predicated region
  $region14: #{advanced_medical_aug.3} parent=0 // pred_check
    _
  $region15: #{advanced_medical_aug.3} parent=0 // pred_check_branch
    %20 = sbr.rel (0) target = $region17
  $region16: #{advanced_medical_aug.3} parent=0 // pred_region
    _
  $region17: #{advanced_medical_aug.3} parent=0 // pred_fallthru
    _
  // Predicated region
  $region18: #{advanced_medical_aug.3} parent=0 // pred_check
    _
  $region19: #{advanced_medical_aug.3} parent=0 // pred_check_branch
    %22 = sbr.rel (0) target = $region21
  $region20: #{advanced_medical_aug.3} parent=0 // pred_region
    _
  $region21: #{advanced_medical_aug.3} parent=0 // pred_fallthru
    _
  // Predicated region
  $region22: #{advanced_medical_aug.3} parent=0 // pred_check
    _
  $region23: #{advanced_medical_aug.3} parent=0 // pred_check_branch
    %24 = sbr.rel (0) target = $region25
  $region24: #{advanced_medical_aug.3} parent=0 // pred_region
    _
  $region25: #{advanced_medical_aug.3} parent=0 // pred_fallthru
    _
  %v25 = vld [vmem:[%s1] sm:$0xf]
  %v26 = vsub.f32 1.0, %v25
  %v27 = vld [vmem:[%s0] sm:$0xff]
  %v29 = vrot.slane %v26, 7
  %v30 = vrot.slane %v29, 2
  %v32 = vmul.f32 %v26, %v30
  %v34 = vlaneseq
  %v35 = vshrl.u32 %v34, 7
  %v36 = vsub.s32 0, %v35
  %v37 = vrot.slane %v32, %v36
  %v38 = vlaneseq
  %v39 = vshrl.u32 %v38, 7
  %v40 = vsub.s32 2, %v39
  %v41 = vrot.slane %v32, %v40
  %v44 = vlaneseq
  %v45 = vshrl.u32 %v44, 7
  %v46 = vsub.s32 0, %v45
  %v47 = vrot.slane %v37, %v46
  %v48 = vlaneseq
  %v49 = vshrl.u32 %v48, 7
  %v50 = vsub.s32 0, %v49
  %v51 = vrot.slane %v41, %v50
  %v54 = vcombine.low %v47, %v51
  %v56 = vmul.f32 %v27, %v54
  %s57 = scalar_lea.vmem %s0, 8
  %v58 = vld [vmem:[%s57] sm:$0xff]
  %v60 = vrot.slane %v25, 7
  %v61 = vrot.slane %v60, 2
  %v63 = vmul.f32 %v26, %v61
  %v65 = vlaneseq
  %v66 = vshrl.u32 %v65, 7
  %v67 = vsub.s32 0, %v66
  %v68 = vrot.slane %v63, %v67
  %v69 = vlaneseq
  %v70 = vshrl.u32 %v69, 7
  %v71 = vsub.s32 2, %v70
  %v72 = vrot.slane %v63, %v71
  %v75 = vlaneseq
  %v76 = vshrl.u32 %v75, 7
  %v77 = vsub.s32 0, %v76
  %v78 = vrot.slane %v68, %v77
  %v79 = vlaneseq
  %v80 = vshrl.u32 %v79, 7
  %v81 = vsub.s32 0, %v80
  %v82 = vrot.slane %v72, %v81
  %v85 = vcombine.low %v78, %v82
  %v87 = vmul.f32 %v58, %v85
  %v88 = vadd.f32 %v56, %v87
  %s89 = scalar_lea.vmem %s0, 16
  %v90 = vld [vmem:[%s89] sm:$0xff]
  %v91 = vmul.f32 %v25, %v30
  %v93 = vlaneseq
  %v94 = vshrl.u32 %v93, 7
  %v95 = vsub.s32 0, %v94
  %v96 = vrot.slane %v91, %v95
  %v97 = vlaneseq
  %v98 = vshrl.u32 %v97, 7
  %v99 = vsub.s32 2, %v98
  %v100 = vrot.slane %v91, %v99
  %v103 = vlaneseq
  %v104 = vshrl.u32 %v103, 7
  %v105 = vsub.s32 0, %v104
  %v106 = vrot.slane %v96, %v105
  %v107 = vlaneseq
  %v108 = vshrl.u32 %v107, 7
  %v109 = vsub.s32 0, %v108
  %v110 = vrot.slane %v100, %v109
  %v113 = vcombine.low %v106, %v110
  %v115 = vmul.f32 %v90, %v113
  %v116 = vadd.f32 %v88, %v115
  %s117 = scalar_lea.vmem %s0, 24
  %v118 = vld [vmem:[%s117] sm:$0xff]
  %v119 = vmul.f32 %v25, %v61
  %v121 = vlaneseq
  %v122 = vshrl.u32 %v121, 7
  %v123 = vsub.s32 0, %v122
  %v124 = vrot.slane %v119, %v123
  %v125 = vlaneseq
  %v126 = vshrl.u32 %v125, 7
  %v127 = vsub.s32 2, %v126
  %v128 = vrot.slane %v119, %v127
  %v131 = vlaneseq
  %v132 = vshrl.u32 %v131, 7
  %v133 = vsub.s32 0, %v132
  %v134 = vrot.slane %v124, %v133
  %v135 = vlaneseq
  %v136 = vshrl.u32 %v135, 7
  %v137 = vsub.s32 0, %v136
  %v138 = vrot.slane %v128, %v137
  %v141 = vcombine.low %v134, %v138
  %v143 = vmul.f32 %v118, %v141
  %v144 = vadd.f32 %v116, %v143
  %v145 = vld [vmem:[%s3] sm:$0xf]
  %147 = vset.pattern.permute.xlu0 0
  %148 = vperm.xlu0 %147, %v145
  %v149 = vpop.permute.xlu0 %148
  %v151 = vunpack.c.l.s4 839922192
  %v152 = vunpack.c.0.s8 %v151
  %v153 = vlaneseq
  %v154 = vshrl.u32 %v153, 7
  %v155 = vsub.s32 %v152, %v154
  %v156 = vrot.slane %v149, %v155
  %v158 = vmul.f32 %v144, %v156
  %v159 = vmax.f32 %v158, 0.0
  %v160 = vmin.f32 %v159, 1.0
  %v161 = vld [vmem:[%s5] sm:$0xff]
  %v162 = vld [vmem:[%s4] sm:$0xf]
  %164 = vset.pattern.permute.xlu0 0
  %165 = vperm.xlu0 %164, %v162
  %v166 = vpop.permute.xlu0 %165
  %v168 = vunpack.c.l.s4 839922192
  %v169 = vunpack.c.0.s8 %v168
  %v170 = vlaneseq
  %v171 = vshrl.u32 %v170, 7
  %v172 = vsub.s32 %v169, %v171
  %v173 = vrot.slane %v166, %v172
  %v175 = vmul.f32 %v161, %v173
  %v176 = vadd.f32 %v160, %v175
  %v177 = vmax.f32 %v176, 0.0
  %v178 = vmin.f32 %v177, 1.0
  %179 = vst [vmem:[%s6] sm:$0xff] %v178
  %v180 = vld [vmem:[%s2] sm:$0x3]
  %v181 = vlaneseq
  %vm182 = vcmp.ge.s32.totalorder %v181, 0
  %vm183 = vcmp.lt.s32.totalorder %v181, 256
  %vm184 = vmand %vm182, %vm183
  %185 = vst.msk [vmem:[%s7] sm:$0x3] %vm184, %v180
  // Predicated region
  $region26: #{advanced_medical_aug.3} parent=0 // pred_check
    _
  $region27: #{advanced_medical_aug.3} parent=0 // pred_check_branch
    %187 = sbr.rel (0) target = $region29
  $region28: #{advanced_medical_aug.3} parent=0 // pred_region
    _
  $region29: #{advanced_medical_aug.3} parent=0 // pred_fallthru
    _
  // Predicated region
  $region30: #{advanced_medical_aug.3} parent=0 // pred_check
    _
  $region31: #{advanced_medical_aug.3} parent=0 // pred_check_branch
    %189 = sbr.rel (0) target = $region33
  $region32: #{advanced_medical_aug.3} parent=0 // pred_region
    _
  $region33: #{advanced_medical_aug.3} parent=0 // pred_fallthru
    _
  // Predicated region
  $region34: #{advanced_medical_aug.3} parent=0 // pred_check
    _
  $region35: #{advanced_medical_aug.3} parent=0 // pred_check_branch
    %191 = sbr.rel (0) target = $region37
  $region36: #{advanced_medical_aug.3} parent=0 // pred_region
    _
  $region37: #{advanced_medical_aug.3} parent=0 // pred_fallthru
    _
  // Predicated region
  $region38: #{advanced_medical_aug.3} parent=0 // pred_check
    _
  $region39: #{advanced_medical_aug.3} parent=0 // pred_check_branch
    %193 = sbr.rel (0) target = $region41
  $region40: #{advanced_medical_aug.3} parent=0 // pred_region
    _
  $region41: #{advanced_medical_aug.3} parent=0 // pred_fallthru
    _

</llo_original>
